<compile_context>
chip_gen: v5e
topology: v5e:2x2
jax: 0.10.0
libtpu: 0.0.40
codegen_flags: <defaults>
</compile_context>

<pallas_src>
import functools

import jax
import jax.numpy as jnp
from jax.experimental import pallas as pl
from jax.experimental.pallas import tpu as pltpu


def _round_up(x, m):
    return (x + m - 1) // m * m


def _mlp_kernel(x_ref, wgu_ref, wd_ref, o_ref, acc_ref, *, tile_i):
    # x_ref:   (TM, H)        bf16 token tile
    # wgu_ref: (H, 2*TI)      bf16 merged [gate | up] slice for this I-tile
    # wd_ref:  (TI, H)        bf16 down-proj slice for this I-tile
    # o_ref:   (TM, H)        bf16 output tile
    # acc_ref: (TM, H)        f32 accumulator scratch (persists across the I grid axis)
    k = pl.program_id(1)

    @pl.when(k == 0)
    def _():
        acc_ref[...] = jnp.zeros_like(acc_ref)

    # Single merged gate/up matmul: bf16 x bf16 -> f32 on the MXU.
    gate_up = jnp.dot(x_ref[...], wgu_ref[...], preferred_element_type=jnp.float32)
    gate = gate_up[:, :tile_i]
    up = gate_up[:, tile_i:]

    # SiluAndMul in f32 (sigmoid goes to the EUP, mul to the VPU).
    act = gate * jax.nn.sigmoid(gate) * up

    # Down-projection partial sum for this I-slice (bf16 MXU inputs, f32 accumulate).
    acc_ref[...] += jnp.dot(act.astype(wd_ref.dtype), wd_ref[...],
                            preferred_element_type=jnp.float32)

    @pl.when(k == pl.num_programs(1) - 1)
    def _():
        o_ref[...] = acc_ref[...].astype(o_ref.dtype)


def _working_set_bytes(tile_m, tile_i, H):
    bpe = 2  # bf16
    return (2 * tile_m * H * bpe          # x tile (double-buffered)
            + 2 * H * 2 * tile_i * bpe    # merged gate/up slice (double-buffered)
            + 2 * tile_i * H * bpe        # down slice (double-buffered)
            + 2 * tile_m * H * bpe        # output tile (double-buffered)
            + tile_m * H * 4)             # f32 accumulator scratch


def deepseek_v2_mlp(x, w_gate, w_up, w_down, *, tile_m=256, tile_i=512):
    """DeepseekV2MLP forward:  (silu(x @ w_gate) * (x @ w_up)) @ w_down.

    x: [T, H]; w_gate, w_up: [H, I]; w_down: [I, H].  Returns [T, H] in x.dtype.
    """
    T, H = x.shape
    H2, I = w_gate.shape
    assert H == H2 and w_up.shape == (H, I) and w_down.shape == (I, H)
    assert H % 128 == 0, "hidden_size must be a multiple of 128 (pad weights once outside)"
    assert I % 128 == 0, "intermediate_size must be a multiple of 128"

    cdt = jnp.bfloat16  # native MXU input dtype on v5e/v6e/v7x

    # ---- tile selection -------------------------------------------------
    tile_m = min(tile_m, _round_up(T, 16))     # don't over-tile tiny batches
    tile_m = _round_up(tile_m, 16)             # bf16 sublane packing
    tile_i = min(tile_i, I)
    # Make tile_i a 128-multiple divisor of I.
    while tile_i > 128 and (tile_i % 128 != 0 or I % tile_i != 0):
        tile_i -= 128
    assert tile_i % 128 == 0 and I % tile_i == 0

    # Shrink tile_i until the double-buffered working set fits a conservative VMEM
    # budget (v7x has only 64 MiB physical VMEM per TensorCore).
    vmem_budget = 40 << 20
    while tile_i > 128 and _working_set_bytes(tile_m, tile_i, H) > vmem_budget:
        nxt = tile_i - 128
        while nxt > 128 and I % nxt != 0:
            nxt -= 128
        if I % nxt != 0:
            break
        tile_i = nxt

    T_pad = _round_up(T, tile_m)
    n_m = T_pad // tile_m
    n_k = I // tile_i

    # ---- operands: bf16, ragged token padding, merged gate/up layout ----
    x_p = x.astype(cdt)
    if T_pad != T:
        x_p = jnp.pad(x_p, ((0, T_pad - T), (0, 0)))

    # Merge gate & up (MergedColumnParallelLinear) with per-I-tile interleaving so a
    # single (H, 2*tile_i) BlockSpec fetches both halves for tile k.  One-time layout
    # work; under jit with constant weights this folds away.
    wg_t = w_gate.astype(cdt).reshape(H, n_k, tile_i)
    wu_t = w_up.astype(cdt).reshape(H, n_k, tile_i)
    w_gu = jnp.concatenate([wg_t, wu_t], axis=2).reshape(H, 2 * I)
    w_d = w_down.astype(cdt)

    # ---- explicit VMEM limit (v5e default scope is 16 MiB) --------------
    est = _working_set_bytes(tile_m, tile_i, H)
    vmem_limit = max(32 << 20, min(int(est * 1.5) + (2 << 20), 60 << 20))

    out = pl.pallas_call(
        functools.partial(_mlp_kernel, tile_i=tile_i),
        out_shape=jax.ShapeDtypeStruct((T_pad, H), cdt),
        grid_spec=pltpu.PrefetchScalarGridSpec(
            num_scalar_prefetch=0,
            grid=(n_m, n_k),                                          # reduction axis last
            in_specs=[
                pl.BlockSpec((tile_m, H), lambda i, k: (i, 0)),       # x tile
                pl.BlockSpec((H, 2 * tile_i), lambda i, k: (0, k)),   # merged gate/up slice
                pl.BlockSpec((tile_i, H), lambda i, k: (k, 0)),       # down-proj slice
            ],
            out_specs=pl.BlockSpec((tile_m, H), lambda i, k: (i, 0)),
            scratch_shapes=[pltpu.VMEM((tile_m, H), jnp.float32)],
        ),
        compiler_params=pltpu.CompilerParams(
            dimension_semantics=("parallel", "arbitrary"),
            vmem_limit_bytes=vmem_limit,
        ),
    )(x_p, w_gu, w_d)

    if T_pad != T:
        out = out[:T]
    return out.astype(x.dtype)


def deepseek_v2_mlp_ref(x, w_gate, w_up, w_down):
    xf = x.astype(jnp.float32)
    gate = xf @ w_gate.astype(jnp.float32)
    up = xf @ w_up.astype(jnp.float32)
    act = jax.nn.silu(gate) * up
    return act @ w_down.astype(jnp.float32)


if __name__ == "__main__":
    # Small, tile-friendly shapes consistent with the MLP: 40 tokens (exercises the
    # ragged-token padding), hidden=256, intermediate=512, two streamed I-tiles of 256.
    T, H, I = 40, 256, 512

    key = jax.random.PRNGKey(0)
    kx, kg, ku, kd = jax.random.split(key, 4)

    x = jax.random.normal(kx, (T, H), dtype=jnp.float32).astype(jnp.bfloat16)
    w_gate = (jax.random.normal(kg, (H, I), dtype=jnp.float32) * (1.0 / H) ** 0.5).astype(jnp.bfloat16)
    w_up = (jax.random.normal(ku, (H, I), dtype=jnp.float32) * (1.0 / H) ** 0.5).astype(jnp.bfloat16)
    w_down = (jax.random.normal(kd, (I, H), dtype=jnp.float32) * (1.0 / I) ** 0.5).astype(jnp.bfloat16)

    out = deepseek_v2_mlp(x, w_gate, w_up, w_down, tile_m=256, tile_i=256)
    out = jax.block_until_ready(out)

    ref = deepseek_v2_mlp_ref(x, w_gate, w_up, w_down)
    assert out.shape == (T, H)
    out_f32 = out.astype(jnp.float32)
    max_err = float(jnp.max(jnp.abs(out_f32 - ref)))
    assert jnp.allclose(out_f32, ref, atol=5e-2, rtol=5e-2), f"mismatch vs reference (max abs err {max_err})"

    print("KERNEL_OK")
</pallas_src>

<mosaic_0001>
module attributes {stable_mosaic.version = 11 : i64} {
  func.func @_mlp_kernel(%arg0: i32, %arg1: i32, %arg2: memref<48x256xbf16, #tpu.memory_space<vmem>>, %arg3: memref<256x512xbf16, #tpu.memory_space<vmem>>, %arg4: memref<256x256xbf16, #tpu.memory_space<vmem>>, %arg5: memref<48x256xbf16, #tpu.memory_space<vmem>>, %arg6: memref<48x256xf32, #tpu.memory_space<vmem>>) attributes {dimension_semantics = [#tpu.dimension_semantics<parallel>, #tpu.dimension_semantics<arbitrary>], iteration_bounds = array<i64: 1, 2>, scalar_prefetch = 0 : i64, scratch_operands = 1 : i64, tpu.core_type = #tpu.core_type<tc>, window_params = [{transform_indices = @transform_0, window_bounds = array<i64: 48, 256>}, {transform_indices = @transform_1, window_bounds = array<i64: 256, 512>}, {transform_indices = @transform_2, window_bounds = array<i64: 256, 256>}, {transform_indices = @transform_3, window_bounds = array<i64: 48, 256>}]} {
    %c0_i32 = arith.constant 0 : i32
    %0 = arith.cmpi eq, %arg1, %c0_i32 : i32
    %1 = arith.extui %0 : i1 to i32
    %c0_i32_0 = arith.constant 0 : i32
    %2 = arith.cmpi ne, %1, %c0_i32_0 : i32
    scf.if %2 {
      %cst_13 = arith.constant 0.000000e+00 : f32
      %24 = vector.broadcast %cst_13 : f32 to vector<48x256xf32>
      %c0_14 = arith.constant 0 : index
      %c0_15 = arith.constant 0 : index
      %25 = vector.load %arg6[%c0_14, %c0_15] : memref<48x256xf32, #tpu.memory_space<vmem>>, vector<48x256xf32>
      tpu.vector_store %arg6[%c0_14, %c0_15], %24 {strides = array<i32>} : memref<48x256xf32, #tpu.memory_space<vmem>>, vector<48x256xf32>,
    } else {
    }
    %c0 = arith.constant 0 : index
    %c0_1 = arith.constant 0 : index
    %3 = vector.load %arg2[%c0, %c0_1] : memref<48x256xbf16, #tpu.memory_space<vmem>>, vector<48x256xbf16>
    %c0_2 = arith.constant 0 : index
    %c0_3 = arith.constant 0 : index
    %4 = vector.load %arg3[%c0_2, %c0_3] : memref<256x512xbf16, #tpu.memory_space<vmem>>, vector<256x512xbf16>
    %cst = arith.constant dense<0.000000e+00> : vector<48x512xf32>
    %5 = tpu.matmul %3, %4, %cst {dimension_numbers = #tpu.dot_dimension_numbers<[1], [0], [0], [1], [0, 0, 1, 1], [], []>} : vector<48x256xbf16>, vector<256x512xbf16>, vector<48x512xf32> -> vector<48x512xf32>
    %6 = vector.extract_strided_slice %5 {offsets = [0, 0], sizes = [48, 256], strides = [1, 1]} : vector<48x512xf32> to vector<48x256xf32>
    %7 = vector.extract_strided_slice %5 {offsets = [0, 256], sizes = [48, 256], strides = [1, 1]} : vector<48x512xf32> to vector<48x256xf32>
    %8 = arith.negf %6 : vector<48x256xf32>
    %9 = math.exp %8 : vector<48x256xf32>
    %cst_4 = arith.constant 1.000000e+00 : f32
    %10 = vector.broadcast %cst_4 : f32 to vector<48x256xf32>
    %11 = arith.addf %10, %9 : vector<48x256xf32>
    %12 = arith.divf %10, %11 : vector<48x256xf32>
    %13 = arith.mulf %6, %12 : vector<48x256xf32>
    %14 = arith.mulf %13, %7 : vector<48x256xf32>
    %c0_5 = arith.constant 0 : index
    %c0_6 = arith.constant 0 : index
    %15 = vector.load %arg6[%c0_5, %c0_6] : memref<48x256xf32, #tpu.memory_space<vmem>>, vector<48x256xf32>
    %16 = arith.truncf %14 : vector<48x256xf32> to vector<48x256xbf16>
    %c0_7 = arith.constant 0 : index
    %c0_8 = arith.constant 0 : index
    %17 = vector.load %arg4[%c0_7, %c0_8] : memref<256x256xbf16, #tpu.memory_space<vmem>>, vector<256x256xbf16>
    %cst_9 = arith.constant dense<0.000000e+00> : vector<48x256xf32>
    %18 = tpu.matmul %16, %17, %cst_9 {dimension_numbers = #tpu.dot_dimension_numbers<[1], [0], [0], [1], [0, 0, 1, 1], [], []>} : vector<48x256xbf16>, vector<256x256xbf16>, vector<48x256xf32> -> vector<48x256xf32>
    %19 = arith.addf %15, %18 : vector<48x256xf32>
    %c0_10 = arith.constant 0 : index
    %c0_11 = arith.constant 0 : index
    %20 = vector.load %arg6[%c0_10, %c0_11] : memref<48x256xf32, #tpu.memory_space<vmem>>, vector<48x256xf32>
    tpu.vector_store %arg6[%c0_10, %c0_11], %19 {strides = array<i32>} : memref<48x256xf32, #tpu.memory_space<vmem>>, vector<48x256xf32>,
    %c1_i32 = arith.constant 1 : i32
    %21 = arith.cmpi eq, %arg1, %c1_i32 : i32
    %22 = arith.extui %21 : i1 to i32
    %c0_i32_12 = arith.constant 0 : i32
    %23 = arith.cmpi ne, %22, %c0_i32_12 : i32
    scf.if %23 {
      %c0_13 = arith.constant 0 : index
      %c0_14 = arith.constant 0 : index
      %24 = vector.load %arg6[%c0_13, %c0_14] : memref<48x256xf32, #tpu.memory_space<vmem>>, vector<48x256xf32>
      %25 = arith.truncf %24 : vector<48x256xf32> to vector<48x256xbf16>
      %c0_15 = arith.constant 0 : index
      %c0_16 = arith.constant 0 : index
      %26 = vector.load %arg5[%c0_15, %c0_16] : memref<48x256xbf16, #tpu.memory_space<vmem>>, vector<48x256xbf16>
      tpu.vector_store %arg5[%c0_15, %c0_16], %25 {strides = array<i32>} : memref<48x256xbf16, #tpu.memory_space<vmem>>, vector<48x256xbf16>,
    } else {
    }
    return
  }
  func.func @transform_0(%arg0: i32, %arg1: i32) -> (i32, i32) {
    %c0_i32 = arith.constant 0 : i32
    %c0_i32_0 = arith.constant 0 : i32
    return %arg0, %c0_i32 : i32, i32
  }
  func.func @transform_1(%arg0: i32, %arg1: i32) -> (i32, i32) {
    %c0_i32 = arith.constant 0 : i32
    %c0_i32_0 = arith.constant 0 : i32
    return %c0_i32, %arg1 : i32, i32
  }
  func.func @transform_2(%arg0: i32, %arg1: i32) -> (i32, i32) {
    %c0_i32 = arith.constant 0 : i32
    %c0_i32_0 = arith.constant 0 : i32
    return %arg1, %c0_i32 : i32, i32
  }
  func.func @transform_3(%arg0: i32, %arg1: i32) -> (i32, i32) {
    %c0_i32 = arith.constant 0 : i32
    %c0_i32_0 = arith.constant 0 : i32
    return %arg0, %c0_i32 : i32, i32
  }
}

</mosaic_0001>

<llo_original>
// kernel: tpu_custom_call.1
$region0: #{tpu_custom_call.1}
  #allocation0 [shape = 'u32[]', space=smem, size = 0x4, offset = 0x4, fixed_abs, tag = 'smem constant byte address 0x4 - core index']
  #allocation1 [shape = 'u32[72,128]{1,0:T(1,128)}', space=vmem, size = 0x9000, scoped, tag = 'internal scratch']
  #allocation2 [shape = 'f32[48,256]{1,0:T(8,128)}', space=vmem, size = 0xc000, scoped, tag = 'scratch operand']
  %s0 = inlined_call_operand.hbm [shape: bf16[48,256], index: 0, kind: input, shape index: {}]
  %s1 = inlined_call_operand.hbm [shape: bf16[256,1024], index: 1, kind: input, shape index: {}]
  %s2 = inlined_call_operand.hbm [shape: bf16[512,256], index: 2, kind: input, shape index: {}]
  %s3 = inlined_call_operand.hbm [shape: bf16[48,256], index: 3, kind: output, shape index: {}]
  %s4 = sld [smem:[#allocation0]]
  $region65: #{tpu_custom_call.1} parent=0
    _
  %s6 = ssub.s32 1, %s4
  %s7 = scalar_select 0, %s6, %s4
  $region1: #{tpu_custom_call.1} parent=0
    #allocation3 [shape = 'u8[24576]{0}', space=vmem, size = 0x6000, scoped, tag = 'input window, operand 0, single buffered']
    #allocation4 [shape = 's32[2]{0}', space=sflag, size = 0x8, scoped, tag = 'scoped memory for tpu_custom_call.1']
    #allocation5 [shape = 's32[2]{0}', space=sflag, size = 0x8, scoped, tag = 'scoped memory for tpu_custom_call.1']
    #allocation6 [shape = 'u8[524288]{0}', space=vmem, size = 0x80000, scoped, tag = 'input window, operand 1']
    #allocation7 [shape = 's32[2]{0}', space=sflag, size = 0x8, scoped, tag = 'scoped memory for tpu_custom_call.1']
    #allocation8 [shape = 'u8[262144]{0}', space=vmem, size = 0x40000, scoped, tag = 'input window, operand 2']
    #allocation9 [shape = 'u8[24576]{0}', space=vmem, size = 0x6000, scoped, tag = 'output window, operand 0, single buffered']
    %8 = vsyncpa [#allocation4], 0
    %9 = vsyncpa [#allocation7], 0
    %s10 = scalar_lea.sflag [#allocation7], 1
    %11 = vsyncpa %s10, 0
    %12 = vsyncpa [#allocation5], 0
    loop: start=0, step=1, limit=4
    $region2: #{tpu_custom_call.1} parent=1 // loop_pre_header
      _
    $region3: #{tpu_custom_call.1} parent=1 // loop_header
      %s14 = sphi 0, %s18
      %p15 = scmp.ge.s32.totalorder %s14, 4
      %s21 = sphi 0, %s33
      %s22 = sphi 0, %s29
      %s23 = sphi 0, %s21
      %s24 = sphi 0, %s22
      %s25 = sphi 0, %s23
      %s26 = sphi 0, %s24
      %s36 = sphi 0, %s38
      %s39 = sphi 0, %s36
      %s40 = sphi 0, %s39
      %s56 = sphi 0, %s40
      %s62 = sphi 0, %s64
      %s65 = sphi 0, %s62
      %s66 = sphi 0, %s65
      %s82 = sphi 0, %s66
      %s88 = sphi 0, %s90
      %s91 = sphi 0, %s88
      %s92 = sphi 0, %s91
      %s108 = sphi 0, %s92
      %s114 = sphi 0, %s116
      %s117 = sphi 0, %s114
      %s118 = sphi 0, %s117
      %s134 = sphi 0, %s118
    $region4: #{tpu_custom_call.1} parent=1 // loop_header_branch
      %17 = sbr.rel (%p15) target = $region8
    $region5: #{tpu_custom_call.1} parent=1 // loop_body
      %s19 = ssub.s32 %s14, 1
      %s20 = ssub.s32 %s14, 2
      %s27 = sadd.s32 1, %s22
      %p28 = scmp.ge.s32.totalorder %s27, 2
      %s29 = scalar_select %p28, 0, %s27
      %s30 = sadd.s32 1, %s21
      %s31 = scalar_select %p28, %s30, %s21
      %p32 = scmp.ge.s32.totalorder %s31, 1
      %s33 = scalar_select %p32, 0, %s31
      %s34 = ssub.s32 %s21, %s33
      %p35 = scmp.eq.s32.totalorder %s34, 0
      %s37 = sadd.s32 %s36, 1
      %s38 = scalar_select %p35, %s36, %s37
      %p41 = pneg %p35
      %p42 = scmp.eq.s32.totalorder %s14, 1
      %p43 = por %p41, %p42
      %p44 = scmp.ne.s32.totalorder %s36, %s39
      %p45 = scmp.eq.s32.totalorder %s14, 0
      %p46 = por %p44, %p45
      %p47 = scmp.ne.s32.totalorder %s36, %s39
      %p48 = scmp.eq.s32.totalorder %s19, 1
      %p49 = por %p47, %p48
      %p50 = scmp.ne.s32.totalorder %s39, %s40
      %p51 = scmp.eq.s32.totalorder %s19, 0
      %p52 = por %p50, %p51
      %p53 = scmp.ne.s32.totalorder %s39, %s40
      %p54 = scmp.eq.s32.totalorder %s20, 1
      %p55 = por %p53, %p54
      %p57 = scmp.ne.s32.totalorder %s40, %s56
      %p58 = scmp.eq.s32.totalorder %s20, 0
      %p59 = por %p57, %p58
      %s60 = ssub.s32 %s22, %s29
      %p61 = scmp.eq.s32.totalorder %s60, 0
      %s63 = sadd.s32 %s62, 1
      %s64 = scalar_select %p61, %s62, %s63
      %p67 = pneg %p61
      %p68 = scmp.eq.s32.totalorder %s14, 1
      %p69 = por %p67, %p68
      %p70 = scmp.ne.s32.totalorder %s62, %s65
      %p71 = scmp.eq.s32.totalorder %s14, 0
      %p72 = por %p70, %p71
      %p73 = scmp.ne.s32.totalorder %s62, %s65
      %p74 = scmp.eq.s32.totalorder %s19, 1
      %p75 = por %p73, %p74
      %p76 = scmp.ne.s32.totalorder %s65, %s66
      %p77 = scmp.eq.s32.totalorder %s19, 0
      %p78 = por %p76, %p77
      %p79 = scmp.ne.s32.totalorder %s65, %s66
      %p80 = scmp.eq.s32.totalorder %s20, 1
      %p81 = por %p79, %p80
      %p83 = scmp.ne.s32.totalorder %s66, %s82
      %p84 = scmp.eq.s32.totalorder %s20, 0
      %p85 = por %p83, %p84
      %s86 = ssub.s32 %s22, %s29
      %p87 = scmp.eq.s32.totalorder %s86, 0
      %s89 = sadd.s32 %s88, 1
      %s90 = scalar_select %p87, %s88, %s89
      %p93 = pneg %p87
      %p94 = scmp.eq.s32.totalorder %s14, 1
      %p95 = por %p93, %p94
      %p96 = scmp.ne.s32.totalorder %s88, %s91
      %p97 = scmp.eq.s32.totalorder %s14, 0
      %p98 = por %p96, %p97
      %p99 = scmp.ne.s32.totalorder %s88, %s91
      %p100 = scmp.eq.s32.totalorder %s19, 1
      %p101 = por %p99, %p100
      %p102 = scmp.ne.s32.totalorder %s91, %s92
      %p103 = scmp.eq.s32.totalorder %s19, 0
      %p104 = por %p102, %p103
      %p105 = scmp.ne.s32.totalorder %s91, %s92
      %p106 = scmp.eq.s32.totalorder %s20, 1
      %p107 = por %p105, %p106
      %p109 = scmp.ne.s32.totalorder %s92, %s108
      %p110 = scmp.eq.s32.totalorder %s20, 0
      %p111 = por %p109, %p110
      %s112 = ssub.s32 %s21, %s33
      %p113 = scmp.eq.s32.totalorder %s112, 0
      %s115 = sadd.s32 %s114, 1
      %s116 = scalar_select %p113, %s114, %s115
      %p119 = pneg %p113
      %p120 = scmp.eq.s32.totalorder %s14, 1
      %p121 = por %p119, %p120
      %p122 = scmp.ne.s32.totalorder %s114, %s117
      %p123 = scmp.eq.s32.totalorder %s14, 0
      %p124 = por %p122, %p123
      %p125 = scmp.ne.s32.totalorder %s114, %s117
      %p126 = scmp.eq.s32.totalorder %s19, 1
      %p127 = por %p125, %p126
      %p128 = scmp.ne.s32.totalorder %s117, %s118
      %p129 = scmp.eq.s32.totalorder %s19, 0
      %p130 = por %p128, %p129
      %p131 = scmp.ne.s32.totalorder %s117, %s118
      %p132 = scmp.eq.s32.totalorder %s20, 1
      %p133 = por %p131, %p132
      %p135 = scmp.ne.s32.totalorder %s118, %s134
      %p136 = scmp.eq.s32.totalorder %s20, 0
      %p137 = por %p135, %p136
      %p138 = scmp.le.s32.totalorder 1, %s14
      %p139 = scmp.lt.s32.totalorder %s14, 3
      %p140 = pnand %p138, %p139
      %p141 = pneg %p140
      // Predicated region
      $region9: #{tpu_custom_call.1} parent=5 // pred_check
        _
      $region10: #{tpu_custom_call.1} parent=5 // pred_check_branch
        %143 = sbr.rel (%p140) target = $region12
      $region11: #{tpu_custom_call.1} parent=5 // pred_region
        %s144 = ssub.s32 %s14, 1
        // Predicated region
        $region13: #{tpu_custom_call.1} parent=11 // pred_check
          %p145 = pneg %p52
        $region14: #{tpu_custom_call.1} parent=11 // pred_check_branch
          %147 = sbr.rel (%p145) target = $region16
        $region15: #{tpu_custom_call.1} parent=11 // pred_region
          %s148 = smul.u32 6, %s23
          %150 = vsyncadd [#allocation4], 0
          %s151 = smul.addr %s148, 2
          %s152 = smul.addr %s151, 4
          %s153 = scalar_lea.hbm %s0, %s152
          %s154 = sshll.u32 %s153, 4
          %s155 = int_to_ptr.hbm [resolvable:$true] %s154
          %s156 = sshll.u32 [#allocation3], 4
          %s157 = int_to_ptr.vmem [resolvable:$true] %s156
          %162 = dma.hbm_to_vmem [thread:$0]  %s155, 768, %s157, [#allocation4], 128, 128, 8
        $region16: #{tpu_custom_call.1} parent=11 // pred_fallthru
          _
      $region12: #{tpu_custom_call.1} parent=5 // pred_fallthru
        _
      %p163 = scmp.lt.s32.totalorder %s14, 2
      // Predicated region
      $region17: #{tpu_custom_call.1} parent=5 // pred_check
        %p164 = pneg %p163
      $region18: #{tpu_custom_call.1} parent=5 // pred_check_branch
        %166 = sbr.rel (%p164) target = $region20
      $region19: #{tpu_custom_call.1} parent=5 // pred_region
        // Predicated region
        $region21: #{tpu_custom_call.1} parent=19 // pred_check
          %p167 = pneg %p72
        $region22: #{tpu_custom_call.1} parent=19 // pred_check_branch
          %169 = sbr.rel (%p167) target = $region24
        $region23: #{tpu_custom_call.1} parent=19 // pred_region
          %s170 = sand.u32 %s14, 1
          %s171 = scalar_lea.sflag [#allocation7], %s170
          %s172 = sand.u32 %s62, 1
          %s173 = smul.addr %s172, 512
          %s174 = scalar_lea.vmem [#allocation6], %s173
          %s175 = smul.u32 4, %s22
          %177 = vsyncadd %s171, 0
          %s178 = smul.addr %s175, 4
          %s179 = scalar_lea.hbm %s1, %s178
          %s180 = sshll.u32 %s179, 4
          %s181 = int_to_ptr.hbm [resolvable:$true] %s180
          %s182 = sshll.u32 %s174, 4
          %s183 = int_to_ptr.vmem [resolvable:$true] %s182
          %188 = dma.hbm_to_vmem [thread:$0]  %s181, 8192, %s183, %s171, 512, 256, 16
        $region24: #{tpu_custom_call.1} parent=19 // pred_fallthru
          _
        // Predicated region
        $region25: #{tpu_custom_call.1} parent=19 // pred_check
          %p189 = pneg %p98
        $region26: #{tpu_custom_call.1} parent=19 // pred_check_branch
          %191 = sbr.rel (%p189) target = $region28
        $region27: #{tpu_custom_call.1} parent=19 // pred_region
          %s192 = sand.u32 %s14, 1
          %s193 = scalar_lea.sflag [#allocation7], %s192
          %s194 = sand.u32 %s88, 1
          %s195 = smul.addr %s194, 256
          %s196 = scalar_lea.vmem [#allocation8], %s195
          %s197 = smul.u32 32, %s22
          %199 = vsyncadd %s193, 0
          %s200 = smul.addr %s197, 2
          %s201 = smul.addr %s200, 4
          %s202 = scalar_lea.hbm %s2, %s201
          %s203 = sshll.u32 %s202, 4
          %s204 = int_to_ptr.hbm [resolvable:$true] %s203
          %s205 = sshll.u32 %s196, 4
          %s206 = int_to_ptr.vmem [resolvable:$true] %s205
          %211 = dma.hbm_to_vmem [thread:$0]  %s204, 4096, %s206, %s193, 128, 128, 8
        $region28: #{tpu_custom_call.1} parent=19 // pred_fallthru
          _
      $region20: #{tpu_custom_call.1} parent=5 // pred_fallthru
        _
      %p212 = scmp.le.s32.totalorder 1, %s14
      %p213 = scmp.lt.s32.totalorder %s14, 3
      %p214 = pnand %p212, %p213
      %p215 = pneg %p214
      // Predicated region
      $region29: #{tpu_custom_call.1} parent=5 // pred_check
        _
      $region30: #{tpu_custom_call.1} parent=5 // pred_check_branch
        %217 = sbr.rel (%p214) target = $region32
      $region31: #{tpu_custom_call.1} parent=5 // pred_region
        %s218 = ssub.s32 %s14, 1
        // Predicated region
        $region33: #{tpu_custom_call.1} parent=31 // pred_check
          %p219 = pneg %p52
        $region34: #{tpu_custom_call.1} parent=31 // pred_check_branch
          %221 = sbr.rel (%p219) target = $region36
        $region35: #{tpu_custom_call.1} parent=31 // pred_region
          %223 = dma.done [#allocation4], 768
        $region36: #{tpu_custom_call.1} parent=31 // pred_fallthru
          _
        %s224 = sand.u32 %s19, 1
        %s225 = scalar_lea.sflag [#allocation7], %s224
        %s226 = sand.u32 %s65, 1
        %s227 = smul.addr %s226, 512
        %s228 = scalar_lea.vmem [#allocation6], %s227
        // Predicated region
        $region37: #{tpu_custom_call.1} parent=31 // pred_check
          %p229 = pneg %p78
        $region38: #{tpu_custom_call.1} parent=31 // pred_check_branch
          %231 = sbr.rel (%p229) target = $region40
        $region39: #{tpu_custom_call.1} parent=31 // pred_region
          %233 = dma.done %s225, 8192
        $region40: #{tpu_custom_call.1} parent=31 // pred_fallthru
          _
        %s234 = sand.u32 %s19, 1
        %s235 = scalar_lea.sflag [#allocation7], %s234
        %s236 = sand.u32 %s91, 1
        %s237 = smul.addr %s236, 256
        %s238 = scalar_lea.vmem [#allocation8], %s237
        // Predicated region
        $region41: #{tpu_custom_call.1} parent=31 // pred_check
          %p239 = pneg %p104
        $region42: #{tpu_custom_call.1} parent=31 // pred_check_branch
          %241 = sbr.rel (%p239) target = $region44
        $region43: #{tpu_custom_call.1} parent=31 // pred_region
          %243 = dma.done %s235, 4096
        $region44: #{tpu_custom_call.1} parent=31 // pred_fallthru
          _
        %p244 = pneg %p52
        %p245 = pneg %p49
        %s246 = sand.u32 %s19, 1
        %s247 = scalar_lea.sflag [#allocation7], %s246
        %s248 = sand.u32 %s65, 1
        %s249 = smul.addr %s248, 512
        %s250 = scalar_lea.vmem [#allocation6], %s249
        %p251 = pneg %p78
        %p252 = pneg %p75
        %s253 = sand.u32 %s19, 1
        %s254 = scalar_lea.sflag [#allocation7], %s253
        %s255 = sand.u32 %s91, 1
        %s256 = smul.addr %s255, 256
        %s257 = scalar_lea.vmem [#allocation8], %s256
        %p258 = pneg %p104
        %p259 = pneg %p101
        %p260 = pneg %p130
        %p261 = pneg %p127
        %s262 = smul.u32 6, %s23
        %s263 = smul.u32 4, %s24
        %s264 = smul.u32 32, %s24
        %s265 = smul.u32 6, %s23
        %p266 = scmp.eq.s32.totalorder %s24, 0
        // Predicated region
        $region45: #{tpu_custom_call.1} parent=31 // pred_check
          %p267 = pneg %p266
        $region46: #{tpu_custom_call.1} parent=31 // pred_check_branch
          %269 = sbr.rel (%p267) target = $region48
        $region47: #{tpu_custom_call.1} parent=31 // pred_region
          %270 = vst [vmem:[#allocation2] sm:$0xff] 0.0
          %271 = vst [vmem:[#allocation2 + $0x8] sm:$0xff] 0.0
          %272 = vst [vmem:[#allocation2 + $0x10] sm:$0xff] 0.0
          %273 = vst [vmem:[#allocation2 + $0x18] sm:$0xff] 0.0
          %274 = vst [vmem:[#allocation2 + $0x20] sm:$0xff] 0.0
          %275 = vst [vmem:[#allocation2 + $0x28] sm:$0xff] 0.0
          %276 = vst [vmem:[#allocation2 + $0x30] sm:$0xff] 0.0
          %277 = vst [vmem:[#allocation2 + $0x38] sm:$0xff] 0.0
          %278 = vst [vmem:[#allocation2 + $0x40] sm:$0xff] 0.0
          %279 = vst [vmem:[#allocation2 + $0x48] sm:$0xff] 0.0
          %280 = vst [vmem:[#allocation2 + $0x50] sm:$0xff] 0.0
          %281 = vst [vmem:[#allocation2 + $0x58] sm:$0xff] 0.0
        $region48: #{tpu_custom_call.1} parent=31 // pred_fallthru
          _
        %v282 = vld [vmem:[#allocation3] sm:$0xff]
        %v283 = vld [vmem:[#allocation3 + $0x8] sm:$0xff]
        %v284 = vld [vmem:[#allocation3 + $0x10] sm:$0xff]
        %v285 = vld [vmem:[#allocation3 + $0x18] sm:$0xff]
        %v286 = vld [vmem:[#allocation3 + $0x20] sm:$0xff]
        %v287 = vld [vmem:[#allocation3 + $0x28] sm:$0xff]
        %v288 = vld [vmem:[%s228] sm:$0xff]
        %v289 = vld [vmem:[%s228 + $0x8] sm:$0xff]
        %v290 = vld [vmem:[%s228 + $0x10] sm:$0xff]
        %v291 = vld [vmem:[%s228 + $0x18] sm:$0xff]
        %v292 = vld [vmem:[%s228 + $0x20] sm:$0xff]
        %v293 = vld [vmem:[%s228 + $0x28] sm:$0xff]
        %v294 = vld [vmem:[%s228 + $0x30] sm:$0xff]
        %v295 = vld [vmem:[%s228 + $0x38] sm:$0xff]
        %v296 = vld [vmem:[%s228 + $0x40] sm:$0xff]
        %v297 = vld [vmem:[%s228 + $0x48] sm:$0xff]
        %v298 = vld [vmem:[%s228 + $0x50] sm:$0xff]
        %v299 = vld [vmem:[%s228 + $0x58] sm:$0xff]
        %v300 = vld [vmem:[%s228 + $0x60] sm:$0xff]
        %v301 = vld [vmem:[%s228 + $0x68] sm:$0xff]
        %v302 = vld [vmem:[%s228 + $0x70] sm:$0xff]
        %v303 = vld [vmem:[%s228 + $0x78] sm:$0xff]
        %v304 = vld [vmem:[%s228 + $0x80] sm:$0xff]
        %v305 = vld [vmem:[%s228 + $0x88] sm:$0xff]
        %v306 = vld [vmem:[%s228 + $0x90] sm:$0xff]
        %v307 = vld [vmem:[%s228 + $0x98] sm:$0xff]
        %v308 = vld [vmem:[%s228 + $0xa0] sm:$0xff]
        %v309 = vld [vmem:[%s228 + $0xa8] sm:$0xff]
        %v310 = vld [vmem:[%s228 + $0xb0] sm:$0xff]
        %v311 = vld [vmem:[%s228 + $0xb8] sm:$0xff]
        %v312 = vld [vmem:[%s228 + $0xc0] sm:$0xff]
        %v313 = vld [vmem:[%s228 + $0xc8] sm:$0xff]
        %v314 = vld [vmem:[%s228 + $0xd0] sm:$0xff]
        %v315 = vld [vmem:[%s228 + $0xd8] sm:$0xff]
        %v316 = vld [vmem:[%s228 + $0xe0] sm:$0xff]
        %v317 = vld [vmem:[%s228 + $0xe8] sm:$0xff]
        %v318 = vld [vmem:[%s228 + $0xf0] sm:$0xff]
        %v319 = vld [vmem:[%s228 + $0xf8] sm:$0xff]
        %v320 = vld [vmem:[%s228 + $0x100] sm:$0xff]
        %v321 = vld [vmem:[%s228 + $0x108] sm:$0xff]
        %v322 = vld [vmem:[%s228 + $0x110] sm:$0xff]
        %v323 = vld [vmem:[%s228 + $0x118] sm:$0xff]
        %v324 = vld [vmem:[%s228 + $0x120] sm:$0xff]
        %v325 = vld [vmem:[%s228 + $0x128] sm:$0xff]
        %v326 = vld [vmem:[%s228 + $0x130] sm:$0xff]
        %v327 = vld [vmem:[%s228 + $0x138] sm:$0xff]
        %v328 = vld [vmem:[%s228 + $0x140] sm:$0xff]
        %v329 = vld [vmem:[%s228 + $0x148] sm:$0xff]
        %v330 = vld [vmem:[%s228 + $0x150] sm:$0xff]
        %v331 = vld [vmem:[%s228 + $0x158] sm:$0xff]
        %v332 = vld [vmem:[%s228 + $0x160] sm:$0xff]
        %v333 = vld [vmem:[%s228 + $0x168] sm:$0xff]
        %v334 = vld [vmem:[%s228 + $0x170] sm:$0xff]
        %v335 = vld [vmem:[%s228 + $0x178] sm:$0xff]
        %v336 = vld [vmem:[%s228 + $0x180] sm:$0xff]
        %v337 = vld [vmem:[%s228 + $0x188] sm:$0xff]
        %v338 = vld [vmem:[%s228 + $0x190] sm:$0xff]
        %v339 = vld [vmem:[%s228 + $0x198] sm:$0xff]
        %v340 = vld [vmem:[%s228 + $0x1a0] sm:$0xff]
        %v341 = vld [vmem:[%s228 + $0x1a8] sm:$0xff]
        %v342 = vld [vmem:[%s228 + $0x1b0] sm:$0xff]
        %v343 = vld [vmem:[%s228 + $0x1b8] sm:$0xff]
        %v344 = vld [vmem:[%s228 + $0x1c0] sm:$0xff]
        %v345 = vld [vmem:[%s228 + $0x1c8] sm:$0xff]
        %v346 = vld [vmem:[%s228 + $0x1d0] sm:$0xff]
        %v347 = vld [vmem:[%s228 + $0x1d8] sm:$0xff]
        %v348 = vld [vmem:[%s228 + $0x1e0] sm:$0xff]
        %v349 = vld [vmem:[%s228 + $0x1e8] sm:$0xff]
        %v350 = vld [vmem:[%s228 + $0x1f0] sm:$0xff]
        %v351 = vld [vmem:[%s228 + $0x1f8] sm:$0xff]
        %v358 = vunpack.c.l.b16 %v282
        %v359 = vunpack.c.h.b16 %v282
        %v360 = vunpack.c.l.b16 %v283
        %v361 = vunpack.c.h.b16 %v283
        %v362 = vunpack.c.l.b16 %v284
        %v363 = vunpack.c.h.b16 %v284
        %v364 = vunpack.c.l.b16 %v285
        %v365 = vunpack.c.h.b16 %v285
        %v366 = vunpack.c.l.b16 %v286
        %v367 = vunpack.c.h.b16 %v286
        %v368 = vunpack.c.l.b16 %v287
        %v369 = vunpack.c.h.b16 %v287
        %v370 = vpack.c.b16 %v360, %v358
        %v371 = vpack.c.b16 %v361, %v359
        %v372 = vpack.c.b16 %v364, %v362
        %v373 = vpack.c.b16 %v365, %v363
        %v374 = vpack.c.b16 %v368, %v366
        %v375 = vpack.c.b16 %v369, %v367
        %v446 = vunpack.c.l.b16 %v288
        %v447 = vunpack.c.h.b16 %v288
        %v448 = vunpack.c.l.b16 %v289
        %v449 = vunpack.c.h.b16 %v289
        %v450 = vunpack.c.l.b16 %v290
        %v451 = vunpack.c.h.b16 %v290
        %v452 = vunpack.c.l.b16 %v291
        %v453 = vunpack.c.h.b16 %v291
        %v454 = vunpack.c.l.b16 %v292
        %v455 = vunpack.c.h.b16 %v292
        %v456 = vunpack.c.l.b16 %v293
        %v457 = vunpack.c.h.b16 %v293
        %v458 = vunpack.c.l.b16 %v294
        %v459 = vunpack.c.h.b16 %v294
        %v460 = vunpack.c.l.b16 %v295
        %v461 = vunpack.c.h.b16 %v295
        %v462 = vunpack.c.l.b16 %v296
        %v463 = vunpack.c.h.b16 %v296
        %v464 = vunpack.c.l.b16 %v297
        %v465 = vunpack.c.h.b16 %v297
        %v466 = vunpack.c.l.b16 %v298
        %v467 = vunpack.c.h.b16 %v298
        %v468 = vunpack.c.l.b16 %v299
        %v469 = vunpack.c.h.b16 %v299
        %v470 = vunpack.c.l.b16 %v300
        %v471 = vunpack.c.h.b16 %v300
        %v472 = vunpack.c.l.b16 %v301
        %v473 = vunpack.c.h.b16 %v301
        %v474 = vunpack.c.l.b16 %v302
        %v475 = vunpack.c.h.b16 %v302
        %v476 = vunpack.c.l.b16 %v303
        %v477 = vunpack.c.h.b16 %v303
        %v478 = vunpack.c.l.b16 %v304
        %v479 = vunpack.c.h.b16 %v304
        %v480 = vunpack.c.l.b16 %v305
        %v481 = vunpack.c.h.b16 %v305
        %v482 = vunpack.c.l.b16 %v306
        %v483 = vunpack.c.h.b16 %v306
        %v484 = vunpack.c.l.b16 %v307
        %v485 = vunpack.c.h.b16 %v307
        %v486 = vunpack.c.l.b16 %v308
        %v487 = vunpack.c.h.b16 %v308
        %v488 = vunpack.c.l.b16 %v309
        %v489 = vunpack.c.h.b16 %v309
        %v490 = vunpack.c.l.b16 %v310
        %v491 = vunpack.c.h.b16 %v310
        %v492 = vunpack.c.l.b16 %v311
        %v493 = vunpack.c.h.b16 %v311
        %v494 = vunpack.c.l.b16 %v312
        %v495 = vunpack.c.h.b16 %v312
        %v496 = vunpack.c.l.b16 %v313
        %v497 = vunpack.c.h.b16 %v313
        %v498 = vunpack.c.l.b16 %v314
        %v499 = vunpack.c.h.b16 %v314
        %v500 = vunpack.c.l.b16 %v315
        %v501 = vunpack.c.h.b16 %v315
        %v502 = vunpack.c.l.b16 %v316
        %v503 = vunpack.c.h.b16 %v316
        %v504 = vunpack.c.l.b16 %v317
        %v505 = vunpack.c.h.b16 %v317
        %v506 = vunpack.c.l.b16 %v318
        %v507 = vunpack.c.h.b16 %v318
        %v508 = vunpack.c.l.b16 %v319
        %v509 = vunpack.c.h.b16 %v319
        %v510 = vunpack.c.l.b16 %v320
        %v511 = vunpack.c.h.b16 %v320
        %v512 = vunpack.c.l.b16 %v321
        %v513 = vunpack.c.h.b16 %v321
        %v514 = vunpack.c.l.b16 %v322
        %v515 = vunpack.c.h.b16 %v322
        %v516 = vunpack.c.l.b16 %v323
        %v517 = vunpack.c.h.b16 %v323
        %v518 = vunpack.c.l.b16 %v324
        %v519 = vunpack.c.h.b16 %v324
        %v520 = vunpack.c.l.b16 %v325
        %v521 = vunpack.c.h.b16 %v325
        %v522 = vunpack.c.l.b16 %v326
        %v523 = vunpack.c.h.b16 %v326
        %v524 = vunpack.c.l.b16 %v327
        %v525 = vunpack.c.h.b16 %v327
        %v526 = vunpack.c.l.b16 %v328
        %v527 = vunpack.c.h.b16 %v328
        %v528 = vunpack.c.l.b16 %v329
        %v529 = vunpack.c.h.b16 %v329
        %v530 = vunpack.c.l.b16 %v330
        %v531 = vunpack.c.h.b16 %v330
        %v532 = vunpack.c.l.b16 %v331
        %v533 = vunpack.c.h.b16 %v331
        %v534 = vunpack.c.l.b16 %v332
        %v535 = vunpack.c.h.b16 %v332
        %v536 = vunpack.c.l.b16 %v333
        %v537 = vunpack.c.h.b16 %v333
        %v538 = vunpack.c.l.b16 %v334
        %v539 = vunpack.c.h.b16 %v334
        %v540 = vunpack.c.l.b16 %v335
        %v541 = vunpack.c.h.b16 %v335
        %v542 = vunpack.c.l.b16 %v336
        %v543 = vunpack.c.h.b16 %v336
        %v544 = vunpack.c.l.b16 %v337
        %v545 = vunpack.c.h.b16 %v337
        %v546 = vunpack.c.l.b16 %v338
        %v547 = vunpack.c.h.b16 %v338
        %v548 = vunpack.c.l.b16 %v339
        %v549 = vunpack.c.h.b16 %v339
        %v550 = vunpack.c.l.b16 %v340
        %v551 = vunpack.c.h.b16 %v340
        %v552 = vunpack.c.l.b16 %v341
        %v553 = vunpack.c.h.b16 %v341
        %v554 = vunpack.c.l.b16 %v342
        %v555 = vunpack.c.h.b16 %v342
        %v556 = vunpack.c.l.b16 %v343
        %v557 = vunpack.c.h.b16 %v343
        %v558 = vunpack.c.l.b16 %v344
        %v559 = vunpack.c.h.b16 %v344
        %v560 = vunpack.c.l.b16 %v345
        %v561 = vunpack.c.h.b16 %v345
        %v562 = vunpack.c.l.b16 %v346
        %v563 = vunpack.c.h.b16 %v346
        %v564 = vunpack.c.l.b16 %v347
        %v565 = vunpack.c.h.b16 %v347
        %v566 = vunpack.c.l.b16 %v348
        %v567 = vunpack.c.h.b16 %v348
        %v568 = vunpack.c.l.b16 %v349
        %v569 = vunpack.c.h.b16 %v349
        %v570 = vunpack.c.l.b16 %v350
        %v571 = vunpack.c.h.b16 %v350
        %v572 = vunpack.c.l.b16 %v351
        %v573 = vunpack.c.h.b16 %v351
        %v574 = vpack.c.b16 %v450, %v446
        %v575 = vpack.c.b16 %v451, %v447
        %v576 = vpack.c.b16 %v452, %v448
        %v577 = vpack.c.b16 %v453, %v449
        %v578 = vpack.c.b16 %v458, %v454
        %v579 = vpack.c.b16 %v459, %v455
        %v580 = vpack.c.b16 %v460, %v456
        %v581 = vpack.c.b16 %v461, %v457
        %v582 = vpack.c.b16 %v466, %v462
        %v583 = vpack.c.b16 %v467, %v463
        %v584 = vpack.c.b16 %v468, %v464
        %v585 = vpack.c.b16 %v469, %v465
        %v586 = vpack.c.b16 %v474, %v470
        %v587 = vpack.c.b16 %v475, %v471
        %v588 = vpack.c.b16 %v476, %v472
        %v589 = vpack.c.b16 %v477, %v473
        %v590 = vpack.c.b16 %v482, %v478
        %v591 = vpack.c.b16 %v483, %v479
        %v592 = vpack.c.b16 %v484, %v480
        %v593 = vpack.c.b16 %v485, %v481
        %v594 = vpack.c.b16 %v490, %v486
        %v595 = vpack.c.b16 %v491, %v487
        %v596 = vpack.c.b16 %v492, %v488
        %v597 = vpack.c.b16 %v493, %v489
        %v598 = vpack.c.b16 %v498, %v494
        %v599 = vpack.c.b16 %v499, %v495
        %v600 = vpack.c.b16 %v500, %v496
        %v601 = vpack.c.b16 %v501, %v497
        %v602 = vpack.c.b16 %v506, %v502
        %v603 = vpack.c.b16 %v507, %v503
        %v604 = vpack.c.b16 %v508, %v504
        %v605 = vpack.c.b16 %v509, %v505
        %v606 = vpack.c.b16 %v514, %v510
        %v607 = vpack.c.b16 %v515, %v511
        %v608 = vpack.c.b16 %v516, %v512
        %v609 = vpack.c.b16 %v517, %v513
        %v610 = vpack.c.b16 %v522, %v518
        %v611 = vpack.c.b16 %v523, %v519
        %v612 = vpack.c.b16 %v524, %v520
        %v613 = vpack.c.b16 %v525, %v521
        %v614 = vpack.c.b16 %v530, %v526
        %v615 = vpack.c.b16 %v531, %v527
        %v616 = vpack.c.b16 %v532, %v528
        %v617 = vpack.c.b16 %v533, %v529
        %v618 = vpack.c.b16 %v538, %v534
        %v619 = vpack.c.b16 %v539, %v535
        %v620 = vpack.c.b16 %v540, %v536
        %v621 = vpack.c.b16 %v541, %v537
        %v622 = vpack.c.b16 %v546, %v542
        %v623 = vpack.c.b16 %v547, %v543
        %v624 = vpack.c.b16 %v548, %v544
        %v625 = vpack.c.b16 %v549, %v545
        %v626 = vpack.c.b16 %v554, %v550
        %v627 = vpack.c.b16 %v555, %v551
        %v628 = vpack.c.b16 %v556, %v552
        %v629 = vpack.c.b16 %v557, %v553
        %v630 = vpack.c.b16 %v562, %v558
        %v631 = vpack.c.b16 %v563, %v559
        %v632 = vpack.c.b16 %v564, %v560
        %v633 = vpack.c.b16 %v565, %v561
        %v634 = vpack.c.b16 %v570, %v566
        %v635 = vpack.c.b16 %v571, %v567
        %v636 = vpack.c.b16 %v572, %v568
        %v637 = vpack.c.b16 %v573, %v569
        %702 = vmatpush.bf16.msra.mxu0 %v602
        %703 = vmatpush.bf16.msra.mxu0 %v598
        %704 = vmatpush.bf16.msra.mxu0 %v594
        %705 = vmatpush.bf16.msra.mxu0 %v590
        %706 = vmatpush.bf16.msra.mxu0 %v586
        %707 = vmatpush.bf16.msra.mxu0 %v582
        %708 = vmatpush.bf16.msra.mxu0 %v578
        %709 = vmatpush.bf16.msra.mxu0 %v574
        %710 = vmatmul.bf16.gmra.mxu0 %v370
        %v711 = vpop.f32.mrf.mxu0
        %v712 = vadd.f32 0.0, %v711
        %v713 = vpop.f32.mrf.mxu0
        %v714 = vadd.f32 0.0, %v713
        %715 = vmatmul.bf16.gmra.mxu0 %v372
        %v716 = vpop.f32.mrf.mxu0
        %v717 = vadd.f32 0.0, %v716
        %v718 = vpop.f32.mrf.mxu0
        %v719 = vadd.f32 0.0, %v718
        %720 = vmatmul.bf16.gmra.mxu0 %v374
        %v721 = vpop.f32.mrf.mxu0
        %v722 = vadd.f32 0.0, %v721
        %v723 = vpop.f32.mrf.mxu0
        %v724 = vadd.f32 0.0, %v723
        %725 = vdwg.mxu0
        %726 = vmatpush.bf16.msra.mxu0 %v634
        %727 = vmatpush.bf16.msra.mxu0 %v630
        %728 = vmatpush.bf16.msra.mxu0 %v626
        %729 = vmatpush.bf16.msra.mxu0 %v622
        %730 = vmatpush.bf16.msra.mxu0 %v618
        %731 = vmatpush.bf16.msra.mxu0 %v614
        %732 = vmatpush.bf16.msra.mxu0 %v610
        %733 = vmatpush.bf16.msra.mxu0 %v606
        %734 = vmatmul.bf16.gmra.mxu0 %v371
        %v735 = vpop.f32.mrf.mxu0
        %v736 = vadd.f32 %v712, %v735
        %v737 = vpop.f32.mrf.mxu0
        %v738 = vadd.f32 %v714, %v737
        %739 = vmatmul.bf16.gmra.mxu0 %v373
        %v740 = vpop.f32.mrf.mxu0
        %v741 = vadd.f32 %v717, %v740
        %v742 = vpop.f32.mrf.mxu0
        %v743 = vadd.f32 %v719, %v742
        %744 = vmatmul.bf16.gmra.mxu0 %v375
        %v745 = vpop.f32.mrf.mxu0
        %v746 = vadd.f32 %v722, %v745
        %v747 = vpop.f32.mrf.mxu0
        %v748 = vadd.f32 %v724, %v747
        %749 = vdwg.mxu0
        %750 = vmatpush.bf16.msra.mxu0 %v603
        %751 = vmatpush.bf16.msra.mxu0 %v599
        %752 = vmatpush.bf16.msra.mxu0 %v595
        %753 = vmatpush.bf16.msra.mxu0 %v591
        %754 = vmatpush.bf16.msra.mxu0 %v587
        %755 = vmatpush.bf16.msra.mxu0 %v583
        %756 = vmatpush.bf16.msra.mxu0 %v579
        %757 = vmatpush.bf16.msra.mxu0 %v575
        %758 = vmatmul.bf16.gmra.mxu0 %v370
        %v759 = vpop.f32.mrf.mxu0
        %v760 = vadd.f32 0.0, %v759
        %v761 = vpop.f32.mrf.mxu0
        %v762 = vadd.f32 0.0, %v761
        %763 = vmatmul.bf16.gmra.mxu0 %v372
        %v764 = vpop.f32.mrf.mxu0
        %v765 = vadd.f32 0.0, %v764
        %v766 = vpop.f32.mrf.mxu0
        %v767 = vadd.f32 0.0, %v766
        %768 = vmatmul.bf16.gmra.mxu0 %v374
        %v769 = vpop.f32.mrf.mxu0
        %v770 = vadd.f32 0.0, %v769
        %v771 = vpop.f32.mrf.mxu0
        %v772 = vadd.f32 0.0, %v771
        %773 = vdwg.mxu0
        %774 = vmatpush.bf16.msra.mxu0 %v635
        %775 = vmatpush.bf16.msra.mxu0 %v631
        %776 = vmatpush.bf16.msra.mxu0 %v627
        %777 = vmatpush.bf16.msra.mxu0 %v623
        %778 = vmatpush.bf16.msra.mxu0 %v619
        %779 = vmatpush.bf16.msra.mxu0 %v615
        %780 = vmatpush.bf16.msra.mxu0 %v611
        %781 = vmatpush.bf16.msra.mxu0 %v607
        %782 = vmatmul.bf16.gmra.mxu0 %v371
        %v783 = vpop.f32.mrf.mxu0
        %v784 = vadd.f32 %v760, %v783
        %v785 = vpop.f32.mrf.mxu0
        %v786 = vadd.f32 %v762, %v785
        %787 = vmatmul.bf16.gmra.mxu0 %v373
        %v788 = vpop.f32.mrf.mxu0
        %v789 = vadd.f32 %v765, %v788
        %v790 = vpop.f32.mrf.mxu0
        %v791 = vadd.f32 %v767, %v790
        %792 = vmatmul.bf16.gmra.mxu0 %v375
        %v793 = vpop.f32.mrf.mxu0
        %v794 = vadd.f32 %v770, %v793
        %v795 = vpop.f32.mrf.mxu0
        %v796 = vadd.f32 %v772, %v795
        %797 = vdwg.mxu0
        %798 = vmatpush.bf16.msra.mxu0 %v604
        %799 = vmatpush.bf16.msra.mxu0 %v600
        %800 = vmatpush.bf16.msra.mxu0 %v596
        %801 = vmatpush.bf16.msra.mxu0 %v592
        %802 = vmatpush.bf16.msra.mxu0 %v588
        %803 = vmatpush.bf16.msra.mxu0 %v584
        %804 = vmatpush.bf16.msra.mxu0 %v580
        %805 = vmatpush.bf16.msra.mxu0 %v576
        %806 = vmatmul.bf16.gmra.mxu0 %v370
        %v807 = vpop.f32.mrf.mxu0
        %v808 = vadd.f32 0.0, %v807
        %v809 = vpop.f32.mrf.mxu0
        %v810 = vadd.f32 0.0, %v809
        %811 = vmatmul.bf16.gmra.mxu0 %v372
        %v812 = vpop.f32.mrf.mxu0
        %v813 = vadd.f32 0.0, %v812
        %v814 = vpop.f32.mrf.mxu0
        %v815 = vadd.f32 0.0, %v814
        %816 = vmatmul.bf16.gmra.mxu0 %v374
        %v817 = vpop.f32.mrf.mxu0
        %v818 = vadd.f32 0.0, %v817
        %v819 = vpop.f32.mrf.mxu0
        %v820 = vadd.f32 0.0, %v819
        %821 = vdwg.mxu0
        %822 = vmatpush.bf16.msra.mxu0 %v636
        %823 = vmatpush.bf16.msra.mxu0 %v632
        %824 = vmatpush.bf16.msra.mxu0 %v628
        %825 = vmatpush.bf16.msra.mxu0 %v624
        %826 = vmatpush.bf16.msra.mxu0 %v620
        %827 = vmatpush.bf16.msra.mxu0 %v616
        %828 = vmatpush.bf16.msra.mxu0 %v612
        %829 = vmatpush.bf16.msra.mxu0 %v608
        %830 = vmatmul.bf16.gmra.mxu0 %v371
        %v831 = vpop.f32.mrf.mxu0
        %v832 = vadd.f32 %v808, %v831
        %v833 = vpop.f32.mrf.mxu0
        %v834 = vadd.f32 %v810, %v833
        %835 = vmatmul.bf16.gmra.mxu0 %v373
        %v836 = vpop.f32.mrf.mxu0
        %v837 = vadd.f32 %v813, %v836
        %v838 = vpop.f32.mrf.mxu0
        %v839 = vadd.f32 %v815, %v838
        %840 = vmatmul.bf16.gmra.mxu0 %v375
        %v841 = vpop.f32.mrf.mxu0
        %v842 = vadd.f32 %v818, %v841
        %v843 = vpop.f32.mrf.mxu0
        %v844 = vadd.f32 %v820, %v843
        %845 = vdwg.mxu0
        %846 = vmatpush.bf16.msra.mxu0 %v605
        %847 = vmatpush.bf16.msra.mxu0 %v601
        %848 = vmatpush.bf16.msra.mxu0 %v597
        %849 = vmatpush.bf16.msra.mxu0 %v593
        %850 = vmatpush.bf16.msra.mxu0 %v589
        %851 = vmatpush.bf16.msra.mxu0 %v585
        %852 = vmatpush.bf16.msra.mxu0 %v581
        %853 = vmatpush.bf16.msra.mxu0 %v577
        %854 = vmatmul.bf16.gmra.mxu0 %v370
        %v855 = vpop.f32.mrf.mxu0
        %v856 = vadd.f32 0.0, %v855
        %v857 = vpop.f32.mrf.mxu0
        %v858 = vadd.f32 0.0, %v857
        %859 = vmatmul.bf16.gmra.mxu0 %v372
        %v860 = vpop.f32.mrf.mxu0
        %v861 = vadd.f32 0.0, %v860
        %v862 = vpop.f32.mrf.mxu0
        %v863 = vadd.f32 0.0, %v862
        %864 = vmatmul.bf16.gmra.mxu0 %v374
        %v865 = vpop.f32.mrf.mxu0
        %v866 = vadd.f32 0.0, %v865
        %v867 = vpop.f32.mrf.mxu0
        %v868 = vadd.f32 0.0, %v867
        %869 = vdwg.mxu0
        %870 = vmatpush.bf16.msra.mxu0 %v637
        %871 = vmatpush.bf16.msra.mxu0 %v633
        %872 = vmatpush.bf16.msra.mxu0 %v629
        %873 = vmatpush.bf16.msra.mxu0 %v625
        %874 = vmatpush.bf16.msra.mxu0 %v621
        %875 = vmatpush.bf16.msra.mxu0 %v617
        %876 = vmatpush.bf16.msra.mxu0 %v613
        %877 = vmatpush.bf16.msra.mxu0 %v609
        %878 = vmatmul.bf16.gmra.mxu0 %v371
        %v879 = vpop.f32.mrf.mxu0
        %v880 = vadd.f32 %v856, %v879
        %v881 = vpop.f32.mrf.mxu0
        %v882 = vadd.f32 %v858, %v881
        %883 = vmatmul.bf16.gmra.mxu0 %v373
        %v884 = vpop.f32.mrf.mxu0
        %v885 = vadd.f32 %v861, %v884
        %v886 = vpop.f32.mrf.mxu0
        %v887 = vadd.f32 %v863, %v886
        %888 = vmatmul.bf16.gmra.mxu0 %v375
        %v889 = vpop.f32.mrf.mxu0
        %v890 = vadd.f32 %v866, %v889
        %v891 = vpop.f32.mrf.mxu0
        %v892 = vadd.f32 %v868, %v891
        %893 = vdwg.mxu0
        %v894 = vxor.u32 %v736, 2147483648
        %v895 = vxor.u32 %v784, 2147483648
        %v896 = vxor.u32 %v738, 2147483648
        %v897 = vxor.u32 %v786, 2147483648
        %v898 = vxor.u32 %v741, 2147483648
        %v899 = vxor.u32 %v789, 2147483648
        %v900 = vxor.u32 %v743, 2147483648
        %v901 = vxor.u32 %v791, 2147483648
        %v902 = vxor.u32 %v746, 2147483648
        %v903 = vxor.u32 %v794, 2147483648
        %v904 = vxor.u32 %v748, 2147483648
        %v905 = vxor.u32 %v796, 2147483648
        %v906 = vmul.f32 %v894, 1.442695
        %v907 = vpow.pop %v906
        %v908 = vmul.f32 %v895, 1.442695
        %v909 = vpow.pop %v908
        %v910 = vmul.f32 %v896, 1.442695
        %v911 = vpow.pop %v910
        %v912 = vmul.f32 %v897, 1.442695
        %v913 = vpow.pop %v912
        %v914 = vmul.f32 %v898, 1.442695
        %v915 = vpow.pop %v914
        %v916 = vmul.f32 %v899, 1.442695
        %v917 = vpow.pop %v916
        %v918 = vmul.f32 %v900, 1.442695
        %v919 = vpow.pop %v918
        %v920 = vmul.f32 %v901, 1.442695
        %v921 = vpow.pop %v920
        %v922 = vmul.f32 %v902, 1.442695
        %v923 = vpow.pop %v922
        %v924 = vmul.f32 %v903, 1.442695
        %v925 = vpow.pop %v924
        %v926 = vmul.f32 %v904, 1.442695
        %v927 = vpow.pop %v926
        %v928 = vmul.f32 %v905, 1.442695
        %v929 = vpow.pop %v928
        %v930 = vadd.f32 %v907, 1.0
        %v931 = vadd.f32 %v909, 1.0
        %v932 = vadd.f32 %v911, 1.0
        %v933 = vadd.f32 %v913, 1.0
        %v934 = vadd.f32 %v915, 1.0
        %v935 = vadd.f32 %v917, 1.0
        %v936 = vadd.f32 %v919, 1.0
        %v937 = vadd.f32 %v921, 1.0
        %v938 = vadd.f32 %v923, 1.0
        %v939 = vadd.f32 %v925, 1.0
        %v940 = vadd.f32 %v927, 1.0
        %v941 = vadd.f32 %v929, 1.0
        %v942 = vrcp.pop %v930
        %v943 = vmul.f32 %v930, %v942
        %v944 = vsub.f32 1.0, %v943
        %v945 = vmul.f32 %v942, %v944
        %v946 = vadd.f32 %v942, %v945
        %vm947 = vweird.f32 %v930
        %vm948 = vweird.f32 %v942
        %vm949 = vmor %vm947, %vm948
        %v950 = vsel %vm949, %v942, %v946
        %v951 = vand.u32 2147483647, %v930
        %vm952 = vcmp.eq.f32.partialorder %v951, 8.507059e+37
        %v953 = vand.u32 %v930, 2147483648
        %v954 = vor.u32 1.1754944e-38, %v953
        %v955 = vsel %vm952, %v954, %v950
        %v956 = vmul.f32 1.0, %v955
        %v957 = vrcp.pop %v931
        %v958 = vmul.f32 %v931, %v957
        %v959 = vsub.f32 1.0, %v958
        %v960 = vmul.f32 %v957, %v959
        %v961 = vadd.f32 %v957, %v960
        %vm962 = vweird.f32 %v931
        %vm963 = vweird.f32 %v957
        %vm964 = vmor %vm962, %vm963
        %v965 = vsel %vm964, %v957, %v961
        %v966 = vand.u32 2147483647, %v931
        %vm967 = vcmp.eq.f32.partialorder %v966, 8.507059e+37
        %v968 = vand.u32 %v931, 2147483648
        %v969 = vor.u32 1.1754944e-38, %v968
        %v970 = vsel %vm967, %v969, %v965
        %v971 = vmul.f32 1.0, %v970
        %v972 = vrcp.pop %v932
        %v973 = vmul.f32 %v932, %v972
        %v974 = vsub.f32 1.0, %v973
        %v975 = vmul.f32 %v972, %v974
        %v976 = vadd.f32 %v972, %v975
        %vm977 = vweird.f32 %v932
        %vm978 = vweird.f32 %v972
        %vm979 = vmor %vm977, %vm978
        %v980 = vsel %vm979, %v972, %v976
        %v981 = vand.u32 2147483647, %v932
        %vm982 = vcmp.eq.f32.partialorder %v981, 8.507059e+37
        %v983 = vand.u32 %v932, 2147483648
        %v984 = vor.u32 1.1754944e-38, %v983
        %v985 = vsel %vm982, %v984, %v980
        %v986 = vmul.f32 1.0, %v985
        %v987 = vrcp.pop %v933
        %v988 = vmul.f32 %v933, %v987
        %v989 = vsub.f32 1.0, %v988
        %v990 = vmul.f32 %v987, %v989
        %v991 = vadd.f32 %v987, %v990
        %vm992 = vweird.f32 %v933
        %vm993 = vweird.f32 %v987
        %vm994 = vmor %vm992, %vm993
        %v995 = vsel %vm994, %v987, %v991
        %v996 = vand.u32 2147483647, %v933
        %vm997 = vcmp.eq.f32.partialorder %v996, 8.507059e+37
        %v998 = vand.u32 %v933, 2147483648
        %v999 = vor.u32 1.1754944e-38, %v998
        %v1000 = vsel %vm997, %v999, %v995
        %v1001 = vmul.f32 1.0, %v1000
        %v1002 = vrcp.pop %v934
        %v1003 = vmul.f32 %v934, %v1002
        %v1004 = vsub.f32 1.0, %v1003
        %v1005 = vmul.f32 %v1002, %v1004
        %v1006 = vadd.f32 %v1002, %v1005
        %vm1007 = vweird.f32 %v934
        %vm1008 = vweird.f32 %v1002
        %vm1009 = vmor %vm1007, %vm1008
        %v1010 = vsel %vm1009, %v1002, %v1006
        %v1011 = vand.u32 2147483647, %v934
        %vm1012 = vcmp.eq.f32.partialorder %v1011, 8.507059e+37
        %v1013 = vand.u32 %v934, 2147483648
        %v1014 = vor.u32 1.1754944e-38, %v1013
        %v1015 = vsel %vm1012, %v1014, %v1010
        %v1016 = vmul.f32 1.0, %v1015
        %v1017 = vrcp.pop %v935
        %v1018 = vmul.f32 %v935, %v1017
        %v1019 = vsub.f32 1.0, %v1018
        %v1020 = vmul.f32 %v1017, %v1019
        %v1021 = vadd.f32 %v1017, %v1020
        %vm1022 = vweird.f32 %v935
        %vm1023 = vweird.f32 %v1017
        %vm1024 = vmor %vm1022, %vm1023
        %v1025 = vsel %vm1024, %v1017, %v1021
        %v1026 = vand.u32 2147483647, %v935
        %vm1027 = vcmp.eq.f32.partialorder %v1026, 8.507059e+37
        %v1028 = vand.u32 %v935, 2147483648
        %v1029 = vor.u32 1.1754944e-38, %v1028
        %v1030 = vsel %vm1027, %v1029, %v1025
        %v1031 = vmul.f32 1.0, %v1030
        %v1032 = vrcp.pop %v936
        %v1033 = vmul.f32 %v936, %v1032
        %v1034 = vsub.f32 1.0, %v1033
        %v1035 = vmul.f32 %v1032, %v1034
        %v1036 = vadd.f32 %v1032, %v1035
        %vm1037 = vweird.f32 %v936
        %vm1038 = vweird.f32 %v1032
        %vm1039 = vmor %vm1037, %vm1038
        %v1040 = vsel %vm1039, %v1032, %v1036
        %v1041 = vand.u32 2147483647, %v936
        %vm1042 = vcmp.eq.f32.partialorder %v1041, 8.507059e+37
        %v1043 = vand.u32 %v936, 2147483648
        %v1044 = vor.u32 1.1754944e-38, %v1043
        %v1045 = vsel %vm1042, %v1044, %v1040
        %v1046 = vmul.f32 1.0, %v1045
        %v1047 = vrcp.pop %v937
        %v1048 = vmul.f32 %v937, %v1047
        %v1049 = vsub.f32 1.0, %v1048
        %v1050 = vmul.f32 %v1047, %v1049
        %v1051 = vadd.f32 %v1047, %v1050
        %vm1052 = vweird.f32 %v937
        %vm1053 = vweird.f32 %v1047
        %vm1054 = vmor %vm1052, %vm1053
        %v1055 = vsel %vm1054, %v1047, %v1051
        %v1056 = vand.u32 2147483647, %v937
        %vm1057 = vcmp.eq.f32.partialorder %v1056, 8.507059e+37
        %v1058 = vand.u32 %v937, 2147483648
        %v1059 = vor.u32 1.1754944e-38, %v1058
        %v1060 = vsel %vm1057, %v1059, %v1055
        %v1061 = vmul.f32 1.0, %v1060
        %v1062 = vrcp.pop %v938
        %v1063 = vmul.f32 %v938, %v1062
        %v1064 = vsub.f32 1.0, %v1063
        %v1065 = vmul.f32 %v1062, %v1064
        %v1066 = vadd.f32 %v1062, %v1065
        %vm1067 = vweird.f32 %v938
        %vm1068 = vweird.f32 %v1062
        %vm1069 = vmor %vm1067, %vm1068
        %v1070 = vsel %vm1069, %v1062, %v1066
        %v1071 = vand.u32 2147483647, %v938
        %vm1072 = vcmp.eq.f32.partialorder %v1071, 8.507059e+37
        %v1073 = vand.u32 %v938, 2147483648
        %v1074 = vor.u32 1.1754944e-38, %v1073
        %v1075 = vsel %vm1072, %v1074, %v1070
        %v1076 = vmul.f32 1.0, %v1075
        %v1077 = vrcp.pop %v939
        %v1078 = vmul.f32 %v939, %v1077
        %v1079 = vsub.f32 1.0, %v1078
        %v1080 = vmul.f32 %v1077, %v1079
        %v1081 = vadd.f32 %v1077, %v1080
        %vm1082 = vweird.f32 %v939
        %vm1083 = vweird.f32 %v1077
        %vm1084 = vmor %vm1082, %vm1083
        %v1085 = vsel %vm1084, %v1077, %v1081
        %v1086 = vand.u32 2147483647, %v939
        %vm1087 = vcmp.eq.f32.partialorder %v1086, 8.507059e+37
        %v1088 = vand.u32 %v939, 2147483648
        %v1089 = vor.u32 1.1754944e-38, %v1088
        %v1090 = vsel %vm1087, %v1089, %v1085
        %v1091 = vmul.f32 1.0, %v1090
        %v1092 = vrcp.pop %v940
        %v1093 = vmul.f32 %v940, %v1092
        %v1094 = vsub.f32 1.0, %v1093
        %v1095 = vmul.f32 %v1092, %v1094
        %v1096 = vadd.f32 %v1092, %v1095
        %vm1097 = vweird.f32 %v940
        %vm1098 = vweird.f32 %v1092
        %vm1099 = vmor %vm1097, %vm1098
        %v1100 = vsel %vm1099, %v1092, %v1096
        %v1101 = vand.u32 2147483647, %v940
        %vm1102 = vcmp.eq.f32.partialorder %v1101, 8.507059e+37
        %v1103 = vand.u32 %v940, 2147483648
        %v1104 = vor.u32 1.1754944e-38, %v1103
        %v1105 = vsel %vm1102, %v1104, %v1100
        %v1106 = vmul.f32 1.0, %v1105
        %v1107 = vrcp.pop %v941
        %v1108 = vmul.f32 %v941, %v1107
        %v1109 = vsub.f32 1.0, %v1108
        %v1110 = vmul.f32 %v1107, %v1109
        %v1111 = vadd.f32 %v1107, %v1110
        %vm1112 = vweird.f32 %v941
        %vm1113 = vweird.f32 %v1107
        %vm1114 = vmor %vm1112, %vm1113
        %v1115 = vsel %vm1114, %v1107, %v1111
        %v1116 = vand.u32 2147483647, %v941
        %vm1117 = vcmp.eq.f32.partialorder %v1116, 8.507059e+37
        %v1118 = vand.u32 %v941, 2147483648
        %v1119 = vor.u32 1.1754944e-38, %v1118
        %v1120 = vsel %vm1117, %v1119, %v1115
        %v1121 = vmul.f32 1.0, %v1120
        %v1122 = vmul.f32 %v736, %v956
        %v1123 = vmul.f32 %v784, %v971
        %v1124 = vmul.f32 %v738, %v986
        %v1125 = vmul.f32 %v786, %v1001
        %v1126 = vmul.f32 %v741, %v1016
        %v1127 = vmul.f32 %v789, %v1031
        %v1128 = vmul.f32 %v743, %v1046
        %v1129 = vmul.f32 %v791, %v1061
        %v1130 = vmul.f32 %v746, %v1076
        %v1131 = vmul.f32 %v794, %v1091
        %v1132 = vmul.f32 %v748, %v1106
        %v1133 = vmul.f32 %v796, %v1121
        %v1134 = vmul.f32 %v1122, %v832
        %v1135 = vmul.f32 %v1123, %v880
        %v1136 = vmul.f32 %v1124, %v834
        %v1137 = vmul.f32 %v1125, %v882
        %v1138 = vmul.f32 %v1126, %v837
        %v1139 = vmul.f32 %v1127, %v885
        %v1140 = vmul.f32 %v1128, %v839
        %v1141 = vmul.f32 %v1129, %v887
        %v1142 = vmul.f32 %v1130, %v842
        %v1143 = vmul.f32 %v1131, %v890
        %v1144 = vmul.f32 %v1132, %v844
        %v1145 = vmul.f32 %v1133, %v892
        %v1146 = vld [vmem:[#allocation2] sm:$0xff]
        %v1147 = vld [vmem:[#allocation2 + $0x8] sm:$0xff]
        %v1148 = vld [vmem:[#allocation2 + $0x10] sm:$0xff]
        %v1149 = vld [vmem:[#allocation2 + $0x18] sm:$0xff]
        %v1150 = vld [vmem:[#allocation2 + $0x20] sm:$0xff]
        %v1151 = vld [vmem:[#allocation2 + $0x28] sm:$0xff]
        %v1152 = vld [vmem:[#allocation2 + $0x30] sm:$0xff]
        %v1153 = vld [vmem:[#allocation2 + $0x38] sm:$0xff]
        %v1154 = vld [vmem:[#allocation2 + $0x40] sm:$0xff]
        %v1155 = vld [vmem:[#allocation2 + $0x48] sm:$0xff]
        %v1156 = vld [vmem:[#allocation2 + $0x50] sm:$0xff]
        %v1157 = vld [vmem:[#allocation2 + $0x58] sm:$0xff]
        %v1158 = vpack.c.bf16 %v1136, %v1134
        %v1159 = vpack.c.bf16 %v1137, %v1135
        %v1160 = vpack.c.bf16 %v1140, %v1138
        %v1161 = vpack.c.bf16 %v1141, %v1139
        %v1162 = vpack.c.bf16 %v1144, %v1142
        %v1163 = vpack.c.bf16 %v1145, %v1143
        %v1164 = vld [vmem:[%s238] sm:$0xff]
        %v1165 = vld [vmem:[%s238 + $0x8] sm:$0xff]
        %v1166 = vld [vmem:[%s238 + $0x10] sm:$0xff]
        %v1167 = vld [vmem:[%s238 + $0x18] sm:$0xff]
        %v1168 = vld [vmem:[%s238 + $0x20] sm:$0xff]
        %v1169 = vld [vmem:[%s238 + $0x28] sm:$0xff]
        %v1170 = vld [vmem:[%s238 + $0x30] sm:$0xff]
        %v1171 = vld [vmem:[%s238 + $0x38] sm:$0xff]
        %v1172 = vld [vmem:[%s238 + $0x40] sm:$0xff]
        %v1173 = vld [vmem:[%s238 + $0x48] sm:$0xff]
        %v1174 = vld [vmem:[%s238 + $0x50] sm:$0xff]
        %v1175 = vld [vmem:[%s238 + $0x58] sm:$0xff]
        %v1176 = vld [vmem:[%s238 + $0x60] sm:$0xff]
        %v1177 = vld [vmem:[%s238 + $0x68] sm:$0xff]
        %v1178 = vld [vmem:[%s238 + $0x70] sm:$0xff]
        %v1179 = vld [vmem:[%s238 + $0x78] sm:$0xff]
        %v1180 = vld [vmem:[%s238 + $0x80] sm:$0xff]
        %v1181 = vld [vmem:[%s238 + $0x88] sm:$0xff]
        %v1182 = vld [vmem:[%s238 + $0x90] sm:$0xff]
        %v1183 = vld [vmem:[%s238 + $0x98] sm:$0xff]
        %v1184 = vld [vmem:[%s238 + $0xa0] sm:$0xff]
        %v1185 = vld [vmem:[%s238 + $0xa8] sm:$0xff]
        %v1186 = vld [vmem:[%s238 + $0xb0] sm:$0xff]
        %v1187 = vld [vmem:[%s238 + $0xb8] sm:$0xff]
        %v1188 = vld [vmem:[%s238 + $0xc0] sm:$0xff]
        %v1189 = vld [vmem:[%s238 + $0xc8] sm:$0xff]
        %v1190 = vld [vmem:[%s238 + $0xd0] sm:$0xff]
        %v1191 = vld [vmem:[%s238 + $0xd8] sm:$0xff]
        %v1192 = vld [vmem:[%s238 + $0xe0] sm:$0xff]
        %v1193 = vld [vmem:[%s238 + $0xe8] sm:$0xff]
        %v1194 = vld [vmem:[%s238 + $0xf0] sm:$0xff]
        %v1195 = vld [vmem:[%s238 + $0xf8] sm:$0xff]
        %v1228 = vunpack.c.l.b16 %v1164
        %v1229 = vunpack.c.h.b16 %v1164
        %v1230 = vunpack.c.l.b16 %v1165
        %v1231 = vunpack.c.h.b16 %v1165
        %v1232 = vunpack.c.l.b16 %v1166
        %v1233 = vunpack.c.h.b16 %v1166
        %v1234 = vunpack.c.l.b16 %v1167
        %v1235 = vunpack.c.h.b16 %v1167
        %v1236 = vunpack.c.l.b16 %v1168
        %v1237 = vunpack.c.h.b16 %v1168
        %v1238 = vunpack.c.l.b16 %v1169
        %v1239 = vunpack.c.h.b16 %v1169
        %v1240 = vunpack.c.l.b16 %v1170
        %v1241 = vunpack.c.h.b16 %v1170
        %v1242 = vunpack.c.l.b16 %v1171
        %v1243 = vunpack.c.h.b16 %v1171
        %v1244 = vunpack.c.l.b16 %v1172
        %v1245 = vunpack.c.h.b16 %v1172
        %v1246 = vunpack.c.l.b16 %v1173
        %v1247 = vunpack.c.h.b16 %v1173
        %v1248 = vunpack.c.l.b16 %v1174
        %v1249 = vunpack.c.h.b16 %v1174
        %v1250 = vunpack.c.l.b16 %v1175
        %v1251 = vunpack.c.h.b16 %v1175
        %v1252 = vunpack.c.l.b16 %v1176
        %v1253 = vunpack.c.h.b16 %v1176
        %v1254 = vunpack.c.l.b16 %v1177
        %v1255 = vunpack.c.h.b16 %v1177
        %v1256 = vunpack.c.l.b16 %v1178
        %v1257 = vunpack.c.h.b16 %v1178
        %v1258 = vunpack.c.l.b16 %v1179
        %v1259 = vunpack.c.h.b16 %v1179
        %v1260 = vunpack.c.l.b16 %v1180
        %v1261 = vunpack.c.h.b16 %v1180
        %v1262 = vunpack.c.l.b16 %v1181
        %v1263 = vunpack.c.h.b16 %v1181
        %v1264 = vunpack.c.l.b16 %v1182
        %v1265 = vunpack.c.h.b16 %v1182
        %v1266 = vunpack.c.l.b16 %v1183
        %v1267 = vunpack.c.h.b16 %v1183
        %v1268 = vunpack.c.l.b16 %v1184
        %v1269 = vunpack.c.h.b16 %v1184
        %v1270 = vunpack.c.l.b16 %v1185
        %v1271 = vunpack.c.h.b16 %v1185
        %v1272 = vunpack.c.l.b16 %v1186
        %v1273 = vunpack.c.h.b16 %v1186
        %v1274 = vunpack.c.l.b16 %v1187
        %v1275 = vunpack.c.h.b16 %v1187
        %v1276 = vunpack.c.l.b16 %v1188
        %v1277 = vunpack.c.h.b16 %v1188
        %v1278 = vunpack.c.l.b16 %v1189
        %v1279 = vunpack.c.h.b16 %v1189
        %v1280 = vunpack.c.l.b16 %v1190
        %v1281 = vunpack.c.h.b16 %v1190
        %v1282 = vunpack.c.l.b16 %v1191
        %v1283 = vunpack.c.h.b16 %v1191
        %v1284 = vunpack.c.l.b16 %v1192
        %v1285 = vunpack.c.h.b16 %v1192
        %v1286 = vunpack.c.l.b16 %v1193
        %v1287 = vunpack.c.h.b16 %v1193
        %v1288 = vunpack.c.l.b16 %v1194
        %v1289 = vunpack.c.h.b16 %v1194
        %v1290 = vunpack.c.l.b16 %v1195
        %v1291 = vunpack.c.h.b16 %v1195
        %v1292 = vpack.c.b16 %v1230, %v1228
        %v1293 = vpack.c.b16 %v1231, %v1229
        %v1294 = vpack.c.b16 %v1234, %v1232
        %v1295 = vpack.c.b16 %v1235, %v1233
        %v1296 = vpack.c.b16 %v1238, %v1236
        %v1297 = vpack.c.b16 %v1239, %v1237
        %v1298 = vpack.c.b16 %v1242, %v1240
        %v1299 = vpack.c.b16 %v1243, %v1241
        %v1300 = vpack.c.b16 %v1246, %v1244
        %v1301 = vpack.c.b16 %v1247, %v1245
        %v1302 = vpack.c.b16 %v1250, %v1248
        %v1303 = vpack.c.b16 %v1251, %v1249
        %v1304 = vpack.c.b16 %v1254, %v1252
        %v1305 = vpack.c.b16 %v1255, %v1253
        %v1306 = vpack.c.b16 %v1258, %v1256
        %v1307 = vpack.c.b16 %v1259, %v1257
        %v1308 = vpack.c.b16 %v1262, %v1260
        %v1309 = vpack.c.b16 %v1263, %v1261
        %v1310 = vpack.c.b16 %v1266, %v1264
        %v1311 = vpack.c.b16 %v1267, %v1265
        %v1312 = vpack.c.b16 %v1270, %v1268
        %v1313 = vpack.c.b16 %v1271, %v1269
        %v1314 = vpack.c.b16 %v1274, %v1272
        %v1315 = vpack.c.b16 %v1275, %v1273
        %v1316 = vpack.c.b16 %v1278, %v1276
        %v1317 = vpack.c.b16 %v1279, %v1277
        %v1318 = vpack.c.b16 %v1282, %v1280
        %v1319 = vpack.c.b16 %v1283, %v1281
        %v1320 = vpack.c.b16 %v1286, %v1284
        %v1321 = vpack.c.b16 %v1287, %v1285
        %v1322 = vpack.c.b16 %v1290, %v1288
        %v1323 = vpack.c.b16 %v1291, %v1289
        %1356 = vmatpush.bf16.msra.mxu0 %v1306
        %1357 = vmatpush.bf16.msra.mxu0 %v1304
        %1358 = vmatpush.bf16.msra.mxu0 %v1302
        %1359 = vmatpush.bf16.msra.mxu0 %v1300
        %1360 = vmatpush.bf16.msra.mxu0 %v1298
        %1361 = vmatpush.bf16.msra.mxu0 %v1296
        %1362 = vmatpush.bf16.msra.mxu0 %v1294
        %1363 = vmatpush.bf16.msra.mxu0 %v1292
        %1364 = vmatmul.bf16.gmra.mxu0 %v1158
        %v1365 = vpop.f32.mrf.mxu0
        %v1366 = vadd.f32 0.0, %v1365
        %v1367 = vpop.f32.mrf.mxu0
        %v1368 = vadd.f32 0.0, %v1367
        %1369 = vmatmul.bf16.gmra.mxu0 %v1160
        %v1370 = vpop.f32.mrf.mxu0
        %v1371 = vadd.f32 0.0, %v1370
        %v1372 = vpop.f32.mrf.mxu0
        %v1373 = vadd.f32 0.0, %v1372
        %1374 = vmatmul.bf16.gmra.mxu0 %v1162
        %v1375 = vpop.f32.mrf.mxu0
        %v1376 = vadd.f32 0.0, %v1375
        %v1377 = vpop.f32.mrf.mxu0
        %v1378 = vadd.f32 0.0, %v1377
        %1379 = vdwg.mxu0
        %1380 = vmatpush.bf16.msra.mxu0 %v1322
        %1381 = vmatpush.bf16.msra.mxu0 %v1320
        %1382 = vmatpush.bf16.msra.mxu0 %v1318
        %1383 = vmatpush.bf16.msra.mxu0 %v1316
        %1384 = vmatpush.bf16.msra.mxu0 %v1314
        %1385 = vmatpush.bf16.msra.mxu0 %v1312
        %1386 = vmatpush.bf16.msra.mxu0 %v1310
        %1387 = vmatpush.bf16.msra.mxu0 %v1308
        %1388 = vmatmul.bf16.gmra.mxu0 %v1159
        %v1389 = vpop.f32.mrf.mxu0
        %v1390 = vadd.f32 %v1366, %v1389
        %v1391 = vpop.f32.mrf.mxu0
        %v1392 = vadd.f32 %v1368, %v1391
        %1393 = vmatmul.bf16.gmra.mxu0 %v1161
        %v1394 = vpop.f32.mrf.mxu0
        %v1395 = vadd.f32 %v1371, %v1394
        %v1396 = vpop.f32.mrf.mxu0
        %v1397 = vadd.f32 %v1373, %v1396
        %1398 = vmatmul.bf16.gmra.mxu0 %v1163
        %v1399 = vpop.f32.mrf.mxu0
        %v1400 = vadd.f32 %v1376, %v1399
        %v1401 = vpop.f32.mrf.mxu0
        %v1402 = vadd.f32 %v1378, %v1401
        %1403 = vdwg.mxu0
        %1404 = vmatpush.bf16.msra.mxu0 %v1307
        %1405 = vmatpush.bf16.msra.mxu0 %v1305
        %1406 = vmatpush.bf16.msra.mxu0 %v1303
        %1407 = vmatpush.bf16.msra.mxu0 %v1301
        %1408 = vmatpush.bf16.msra.mxu0 %v1299
        %1409 = vmatpush.bf16.msra.mxu0 %v1297
        %1410 = vmatpush.bf16.msra.mxu0 %v1295
        %1411 = vmatpush.bf16.msra.mxu0 %v1293
        %1412 = vmatmul.bf16.gmra.mxu0 %v1158
        %v1413 = vpop.f32.mrf.mxu0
        %v1414 = vadd.f32 0.0, %v1413
        %v1415 = vpop.f32.mrf.mxu0
        %v1416 = vadd.f32 0.0, %v1415
        %1417 = vmatmul.bf16.gmra.mxu0 %v1160
        %v1418 = vpop.f32.mrf.mxu0
        %v1419 = vadd.f32 0.0, %v1418
        %v1420 = vpop.f32.mrf.mxu0
        %v1421 = vadd.f32 0.0, %v1420
        %1422 = vmatmul.bf16.gmra.mxu0 %v1162
        %v1423 = vpop.f32.mrf.mxu0
        %v1424 = vadd.f32 0.0, %v1423
        %v1425 = vpop.f32.mrf.mxu0
        %v1426 = vadd.f32 0.0, %v1425
        %1427 = vdwg.mxu0
        %1428 = vmatpush.bf16.msra.mxu0 %v1323
        %1429 = vmatpush.bf16.msra.mxu0 %v1321
        %1430 = vmatpush.bf16.msra.mxu0 %v1319
        %1431 = vmatpush.bf16.msra.mxu0 %v1317
        %1432 = vmatpush.bf16.msra.mxu0 %v1315
        %1433 = vmatpush.bf16.msra.mxu0 %v1313
        %1434 = vmatpush.bf16.msra.mxu0 %v1311
        %1435 = vmatpush.bf16.msra.mxu0 %v1309
        %1436 = vmatmul.bf16.gmra.mxu0 %v1159
        %v1437 = vpop.f32.mrf.mxu0
        %v1438 = vadd.f32 %v1414, %v1437
        %v1439 = vpop.f32.mrf.mxu0
        %v1440 = vadd.f32 %v1416, %v1439
        %1441 = vmatmul.bf16.gmra.mxu0 %v1161
        %v1442 = vpop.f32.mrf.mxu0
        %v1443 = vadd.f32 %v1419, %v1442
        %v1444 = vpop.f32.mrf.mxu0
        %v1445 = vadd.f32 %v1421, %v1444
        %1446 = vmatmul.bf16.gmra.mxu0 %v1163
        %v1447 = vpop.f32.mrf.mxu0
        %v1448 = vadd.f32 %v1424, %v1447
        %v1449 = vpop.f32.mrf.mxu0
        %v1450 = vadd.f32 %v1426, %v1449
        %1451 = vdwg.mxu0
        %v1452 = vadd.f32 %v1146, %v1390
        %v1453 = vadd.f32 %v1147, %v1438
        %v1454 = vadd.f32 %v1148, %v1392
        %v1455 = vadd.f32 %v1149, %v1440
        %v1456 = vadd.f32 %v1150, %v1395
        %v1457 = vadd.f32 %v1151, %v1443
        %v1458 = vadd.f32 %v1152, %v1397
        %v1459 = vadd.f32 %v1153, %v1445
        %v1460 = vadd.f32 %v1154, %v1400
        %v1461 = vadd.f32 %v1155, %v1448
        %v1462 = vadd.f32 %v1156, %v1402
        %v1463 = vadd.f32 %v1157, %v1450
        %1464 = vst [vmem:[#allocation2] sm:$0xff] %v1452
        %1465 = vst [vmem:[#allocation2 + $0x8] sm:$0xff] %v1453
        %1466 = vst [vmem:[#allocation2 + $0x10] sm:$0xff] %v1454
        %1467 = vst [vmem:[#allocation2 + $0x18] sm:$0xff] %v1455
        %1468 = vst [vmem:[#allocation2 + $0x20] sm:$0xff] %v1456
        %1469 = vst [vmem:[#allocation2 + $0x28] sm:$0xff] %v1457
        %1470 = vst [vmem:[#allocation2 + $0x30] sm:$0xff] %v1458
        %1471 = vst [vmem:[#allocation2 + $0x38] sm:$0xff] %v1459
        %1472 = vst [vmem:[#allocation2 + $0x40] sm:$0xff] %v1460
        %1473 = vst [vmem:[#allocation2 + $0x48] sm:$0xff] %v1461
        %1474 = vst [vmem:[#allocation2 + $0x50] sm:$0xff] %v1462
        %1475 = vst [vmem:[#allocation2 + $0x58] sm:$0xff] %v1463
        %p1476 = scmp.eq.s32.totalorder %s24, 1
        // Predicated region
        $region49: #{tpu_custom_call.1} parent=31 // pred_check
          %p1477 = pneg %p1476
        $region50: #{tpu_custom_call.1} parent=31 // pred_check_branch
          %1479 = sbr.rel (%p1477) target = $region52
        $region51: #{tpu_custom_call.1} parent=31 // pred_region
          %v1480 = vld [vmem:[#allocation2] sm:$0xff]
          %v1481 = vld [vmem:[#allocation2 + $0x8] sm:$0xff]
          %v1482 = vld [vmem:[#allocation2 + $0x10] sm:$0xff]
          %v1483 = vld [vmem:[#allocation2 + $0x18] sm:$0xff]
          %v1484 = vld [vmem:[#allocation2 + $0x20] sm:$0xff]
          %v1485 = vld [vmem:[#allocation2 + $0x28] sm:$0xff]
          %v1486 = vld [vmem:[#allocation2 + $0x30] sm:$0xff]
          %v1487 = vld [vmem:[#allocation2 + $0x38] sm:$0xff]
          %v1488 = vld [vmem:[#allocation2 + $0x40] sm:$0xff]
          %v1489 = vld [vmem:[#allocation2 + $0x48] sm:$0xff]
          %v1490 = vld [vmem:[#allocation2 + $0x50] sm:$0xff]
          %v1491 = vld [vmem:[#allocation2 + $0x58] sm:$0xff]
          %v1492 = vpack.c.bf16 %v1481, %v1480
          %v1493 = vpack.c.bf16 %v1483, %v1482
          %v1494 = vpack.c.bf16 %v1485, %v1484
          %v1495 = vpack.c.bf16 %v1487, %v1486
          %v1496 = vpack.c.bf16 %v1489, %v1488
          %v1497 = vpack.c.bf16 %v1491, %v1490
          %1498 = vst [vmem:[#allocation9] sm:$0xff] %v1492
          %1499 = vst [vmem:[#allocation9 + $0x8] sm:$0xff] %v1493
          %1500 = vst [vmem:[#allocation9 + $0x10] sm:$0xff] %v1494
          %1501 = vst [vmem:[#allocation9 + $0x18] sm:$0xff] %v1495
          %1502 = vst [vmem:[#allocation9 + $0x20] sm:$0xff] %v1496
          %1503 = vst [vmem:[#allocation9 + $0x28] sm:$0xff] %v1497
        $region52: #{tpu_custom_call.1} parent=31 // pred_fallthru
          _
        // Predicated region
        $region53: #{tpu_custom_call.1} parent=31 // pred_check
          %p1504 = pneg %p127
        $region54: #{tpu_custom_call.1} parent=31 // pred_check_branch
          %1506 = sbr.rel (%p1504) target = $region56
        $region55: #{tpu_custom_call.1} parent=31 // pred_region
          %s1507 = smul.u32 6, %s23
          %1509 = vsyncadd [#allocation5], 0
          %s1510 = smul.addr %s1507, 2
          %s1511 = smul.addr %s1510, 4
          %s1512 = scalar_lea.hbm %s3, %s1511
          %s1513 = sshll.u32 [#allocation9], 4
          %s1514 = int_to_ptr.vmem [resolvable:$true] %s1513
          %s1515 = sshll.u32 %s1512, 4
          %s1516 = int_to_ptr.hbm [resolvable:$true] %s1515
          %1521 = dma.vmem_to_hbm [thread:$0]  %s1514, 768, %s1516, [#allocation5], 128, 128, 8
        $region56: #{tpu_custom_call.1} parent=31 // pred_fallthru
          _
        // Predicated region
        $region57: #{tpu_custom_call.1} parent=31 // pred_check
          %p1522 = pneg %p127
        $region58: #{tpu_custom_call.1} parent=31 // pred_check_branch
          %1524 = sbr.rel (%p1522) target = $region60
        $region59: #{tpu_custom_call.1} parent=31 // pred_region
          %1526 = dma.done [#allocation5], 768
        $region60: #{tpu_custom_call.1} parent=31 // pred_fallthru
          _
      $region32: #{tpu_custom_call.1} parent=5 // pred_fallthru
        _
      %p1527 = scmp.le.s32.totalorder 2, %s14
      // Predicated region
      $region61: #{tpu_custom_call.1} parent=5 // pred_check
        %p1528 = pneg %p1527
      $region62: #{tpu_custom_call.1} parent=5 // pred_check_branch
        %1530 = sbr.rel (%p1528) target = $region64
      $region63: #{tpu_custom_call.1} parent=5 // pred_region
        %s1531 = ssub.s32 %s14, 2
      $region64: #{tpu_custom_call.1} parent=5 // pred_fallthru
        _
    $region6: #{tpu_custom_call.1} parent=1 // loop_footer
      %s18 = sadd.s32 1, %s14
    $region7: #{tpu_custom_call.1} parent=1 // loop_footer_branch
      %13 = sbr.rel target = $region3
    $region8: #{tpu_custom_call.1} parent=1 // loop_exit
      _
    %1532 = vsyncpa [#allocation4], 1
    %s1533 = scalar_lea.sflag [#allocation4], 1
    %1534 = vsyncpa %s1533, 1
    %1535 = vsyncpa [#allocation7], 1
    %s1536 = scalar_lea.sflag [#allocation7], 1
    %1537 = vsyncpa %s1536, 1
    %1538 = vsyncpa [#allocation5], 1
    %s1539 = scalar_lea.sflag [#allocation5], 1
    %1540 = vsyncpa %s1539, 1

</llo_original>
